<compile_context>
chip_gen: v6e
topology: v6e:2x2x1
jax: 0.10.0
libtpu: 0.0.40
codegen_flags: <defaults>
</compile_context>

<pallas_src>
import functools
import math

import jax
import jax.numpy as jnp
from jax.experimental import pallas as pl
from jax.experimental.pallas import tpu as pltpu

_LN2 = math.log(2.0)

# Keep logits f32 by default (exact semantics). Flip to True to halve the
# dominant HBM stream on mem-bound v5e/v6e (~2^-8 relative BCE perturbation).
_LOGITS_BF16 = False


def _round_up(v, m):
    return ((v + m - 1) // m) * m


def _vmem_capacity_bytes():
    try:
        return int(pltpu.get_tpu_info().vmem_capacity_bytes)
    except Exception:
        return 64 << 20  # conservative v7x per-TC figure


_VMEM_CAP = _vmem_capacity_bytes()


def _implication_loss_kernel(x_ref, t_ref, lr_ref, out_ref, *, k, kp):
    # ---- BCE-with-logits partial SUM over this batch tile -----------------
    # Zero-padded rows contribute exactly ln(2) each; corrected in the wrapper
    # (no per-tile row mask -> no (TB,C)-wide compare+select on the hot path).
    x = x_ref[...].astype(jnp.float32)          # (TB, C) logits
    t = t_ref[...].astype(jnp.float32)          # (TB, C) targets (int8 -> f32)
    bce = jnp.maximum(x, 0.0) - x * t + jnp.log1p(jnp.exp(-jnp.abs(x)))
    bce_sum = jnp.sum(bce)

    # ---- implication partial SUM over this batch tile ----------------------
    if k == 0:
        imp_sum = jnp.float32(0.0)              # empty filter -> implication 0
    else:
        lr = lr_ref[...]                        # (TB, 2*Kp) f32 probabilities
        l = lr[:, :kp]                          # lane-aligned split
        r = lr[:, kp:]
        d = jnp.maximum(l - r, 0.0)             # relu(l - r) in [0, 1)
        # d < 1 so exp(d) cannot overflow: no stable-softmax max subtraction.
        e = jnp.exp(d)
        num = jnp.sum(e * d, axis=-1, keepdims=True)   # (TB, 1)
        den = jnp.sum(e, axis=-1, keepdims=True)       # (TB, 1)
        if kp != k:
            # padded lanes have d == 0 -> each adds exp(0)=1 to den, 0 to num
            den = den - jnp.float32(kp - k)
        # sum(softmax(d) * d) == num / den; zero-padded rows give 0 / k == 0
        imp_sum = jnp.sum(num / den)

    # single merged (1,1,2) store: [bce_sum, imp_sum]
    lane = jax.lax.broadcasted_iota(jnp.int32, (1, 1, 2), 2)
    out_ref[...] = jnp.where(lane == 0, bce_sum, imp_sum)


def implication_loss(inp, target, filter_l, filter_r):
    """inp, target: (B, C) float; filter_l / filter_r: (K,) int32 label indices."""
    B, C = inp.shape
    K = int(filter_l.shape[0])
    Kp = _round_up(max(K, 1), 128)              # lane-aligned l/r split point

    # Gather-then-sigmoid (sigmoid commutes with the column gather): never
    # materializes a full (B, C) pred array and runs only 2*Kp*B sigmoids.
    # Padded indices gather column 0 for both halves -> d == 0 on those lanes.
    pad_idx = jnp.zeros((Kp - K,), jnp.int32)
    idx = jnp.concatenate([filter_l.astype(jnp.int32), pad_idx,
                           filter_r.astype(jnp.int32), pad_idx])
    lr = jax.nn.sigmoid(jnp.take(inp, idx, axis=1).astype(jnp.float32))
    # TODO(synk): v5e/v6e variant folding this gather into the kernel as a
    # one-hot (C, 2*Kp) bf16 MXU matmul to drop the lr HBM round-trip entirely.

    # ---- generation-aware batch tiling -------------------------------------
    if _VMEM_CAP >= (96 << 20):                 # v5e / v6e: 128 MiB per TC
        tile_budget, tb_cap = 64 << 20, 1024
    else:                                       # v7x: 64 MiB per TC
        tile_budget, tb_cap = 28 << 20, 512

    x_bytes = 2 if _LOGITS_BF16 else 4
    per_row_io = C * x_bytes + C * 1 + 2 * Kp * 4      # x, int8 t, f32 l|r
    per_row_tmp = 4 * max(2 * Kp * 4, C * 4)           # f32 temporaries
    TB = tile_budget // (2 * per_row_io + per_row_tmp)
    TB = max(32, min(tb_cap, (TB // 32) * 32))         # multiple of 32 (int8 tiling)
    # keep >= 2 grid steps when B allows, so both v7x TensorCores get work
    TB = min(TB, _round_up(-(-B // 2), 32))
    Bp = _round_up(B, TB)
    G = Bp // TB
    # TODO(synk): for label counts C in the tens of thousands, add a second
    # ("arbitrary") grid axis tiling C instead of relying on the TB floor.

    x = inp.astype(jnp.bfloat16 if _LOGITS_BF16 else jnp.float32)
    t = target.astype(jnp.int8)                 # {0,1} exact; 1 byte/elem DMA
    if Bp != B:                                 # zero-pad batch
        x = jnp.pad(x, ((0, Bp - B), (0, 0)))
        t = jnp.pad(t, ((0, Bp - B), (0, 0)))
        lr = jnp.pad(lr, ((0, Bp - B), (0, 0)))

    est = TB * (2 * per_row_io + per_row_tmp) + (4 << 20)
    vmem_limit = int(min(_VMEM_CAP - (8 << 20), max(16 << 20, est)))

    cost = pl.CostEstimate(
        flops=int(5 * Bp * C + 8 * Bp * Kp),
        transcendentals=int(2 * Bp * C + Bp * Kp + Bp),
        bytes_accessed=int(Bp * C * (x_bytes + 1) + Bp * 2 * Kp * 4 + G * 8))

    kernel = functools.partial(_implication_loss_kernel, k=K, kp=Kp)
    part = pl.pallas_call(
        kernel,
        out_shape=jax.ShapeDtypeStruct((G, 1, 2), jnp.float32),
        grid=(G,),
        in_specs=[
            pl.BlockSpec((TB, C), lambda i: (i, 0)),
            pl.BlockSpec((TB, C), lambda i: (i, 0)),
            pl.BlockSpec((TB, 2 * Kp), lambda i: (i, 0)),
        ],
        out_specs=pl.BlockSpec((1, 1, 2), lambda i: (i, 0, 0)),
        compiler_params=pltpu.CompilerParams(
            dimension_semantics=("parallel",),   # megacore-shardable batch axis
            vmem_limit_bytes=vmem_limit),
        cost_estimate=cost,
    )(x, t, lr)

    # SUMS (not means) inside the kernel; exact padded-element correction
    # ((Bp-B)*C zero-padded BCE elements contribute ln(2) each) + one divide.
    bce_sum = jnp.sum(part[:, 0, 0]) - jnp.float32((Bp - B) * C * _LN2)
    imp_sum = jnp.sum(part[:, 0, 1])
    base = bce_sum / (B * C)
    imp = imp_sum / B
    # TODO(synk): optional `non_null_labels` row-subset and the target=None
    # (base_loss = 0) paths of the reference forward are not modeled.
    return base + imp


implication_loss = jax.jit(implication_loss)


def _reference(inp, target, filter_l, filter_r):
    # pure-JAX reference of the same forward, for a sanity check
    x = inp.astype(jnp.float32)
    t = target.astype(jnp.float32)
    base = jnp.mean(jnp.maximum(x, 0.0) - x * t + jnp.log1p(jnp.exp(-jnp.abs(x))))
    pred = jax.nn.sigmoid(x)
    l = pred[:, filter_l]
    r = pred[:, filter_r]
    d = jax.nn.relu(l - r)
    imp = jnp.mean(jnp.sum(jax.nn.softmax(d, axis=-1) * d, axis=-1), axis=0)
    return base + imp


if __name__ == "__main__":
    key = jax.random.PRNGKey(0)
    B, C = 2, 16  # batch, num_labels

    # Deterministic synthetic implication hierarchy (stands in for the ChEBI
    # cache / label-name files): parent of label i is i // 2.
    pairs = [(i, i // 2) for i in range(1, C)]          # (child, parent)
    filter_l = jnp.array([p[0] for p in pairs], dtype=jnp.int32)
    filter_r = jnp.array([p[1] for p in pairs], dtype=jnp.int32)

    k1, k2 = jax.random.split(key)
    inp = jax.random.normal(k1, (B, C), dtype=jnp.float32)       # logits
    target = jax.random.bernoulli(k2, 0.5, (B, C)).astype(jnp.float32)

    loss = implication_loss(inp, target, filter_l, filter_r)
    jax.block_until_ready(loss)

    ref = _reference(inp, target, filter_l, filter_r)
    assert jnp.allclose(loss, ref, atol=1e-4, rtol=1e-4), (loss, ref)

    print("KERNEL_OK")
</pallas_src>

<mosaic_0001>
module attributes {stable_mosaic.version = 11 : i64} {
  func.func @_implication_loss_kernel(%arg0: i32, %arg1: memref<32x16xf32, #tpu.memory_space<vmem>>, %arg2: memref<32x16xi8, #tpu.memory_space<vmem>>, %arg3: memref<32x256xf32, #tpu.memory_space<vmem>>, %arg4: memref<1x1x2xf32, #tpu.memory_space<vmem>>) attributes {dimension_semantics = [#tpu.dimension_semantics<parallel>], iteration_bounds = array<i64: 1>, scalar_prefetch = 0 : i64, scratch_operands = 0 : i64, tpu.core_type = #tpu.core_type<tc>, window_params = [{transform_indices = @transform_0, window_bounds = array<i64: 32, 16>}, {transform_indices = @transform_1, window_bounds = array<i64: 32, 16>}, {transform_indices = @transform_2, window_bounds = array<i64: 32, 256>}, {transform_indices = @transform_3, window_bounds = array<i64: 1, 1, 2>}]} {
    %c0 = arith.constant 0 : index
    %c0_0 = arith.constant 0 : index
    %0 = vector.load %arg1[%c0, %c0_0] : memref<32x16xf32, #tpu.memory_space<vmem>>, vector<32x16xf32>
    %c0_1 = arith.constant 0 : index
    %c0_2 = arith.constant 0 : index
    %1 = vector.load %arg2[%c0_1, %c0_2] : memref<32x16xi8, #tpu.memory_space<vmem>>, vector<32x16xi8>
    %2 = arith.sitofp %1 : vector<32x16xi8> to vector<32x16xf32>
    %cst = arith.constant 0.000000e+00 : f32
    %3 = vector.broadcast %cst : f32 to vector<32x16xf32>
    %4 = arith.maximumf %0, %3 : vector<32x16xf32>
    %5 = arith.mulf %0, %2 : vector<32x16xf32>
    %6 = arith.subf %4, %5 : vector<32x16xf32>
    %7 = math.absf %0 : vector<32x16xf32>
    %cst_3 = arith.constant 0.000000e+00 : f32
    %8 = vector.broadcast %cst_3 : f32 to vector<32x16xf32>
    %9 = arith.subf %8, %7 : vector<32x16xf32>
    %10 = math.exp %9 : vector<32x16xf32>
    %11 = math.log1p %10 : vector<32x16xf32>
    %12 = arith.addf %6, %11 : vector<32x16xf32>
    %13 = vector.shape_cast %12 : vector<32x16xf32> to vector<1x32x16xf32>
    %cst_4 = arith.constant dense<0.000000e+00> : vector<1xf32>
    %14 = vector.multi_reduction <add>, %13, %cst_4 [1, 2] : vector<1x32x16xf32> to vector<1xf32>
    %15 = vector.shape_cast %14 : vector<1xf32> to vector<1x1x1xf32>
    %16 = vector.extract %15[0, 0, 0] : f32 from vector<1x1x1xf32>
    %c0_5 = arith.constant 0 : index
    %c0_6 = arith.constant 0 : index
    %17 = vector.load %arg3[%c0_5, %c0_6] : memref<32x256xf32, #tpu.memory_space<vmem>>, vector<32x256xf32>
    %18 = vector.extract_strided_slice %17 {offsets = [0, 0], sizes = [32, 128], strides = [1, 1]} : vector<32x256xf32> to vector<32x128xf32>
    %19 = vector.extract_strided_slice %17 {offsets = [0, 128], sizes = [32, 128], strides = [1, 1]} : vector<32x256xf32> to vector<32x128xf32>
    %20 = arith.subf %18, %19 : vector<32x128xf32>
    %cst_7 = arith.constant 0.000000e+00 : f32
    %21 = vector.broadcast %cst_7 : f32 to vector<32x128xf32>
    %22 = arith.maximumf %20, %21 : vector<32x128xf32>
    %23 = math.exp %22 : vector<32x128xf32>
    %24 = arith.mulf %23, %22 : vector<32x128xf32>
    %cst_8 = arith.constant dense<0.000000e+00> : vector<32xf32>
    %25 = vector.multi_reduction <add>, %24, %cst_8 [1] : vector<32x128xf32> to vector<32xf32>
    %26 = vector.shape_cast %25 : vector<32xf32> to vector<32x1xf32>
    %cst_9 = arith.constant dense<0.000000e+00> : vector<32xf32>
    %27 = vector.multi_reduction <add>, %23, %cst_9 [1] : vector<32x128xf32> to vector<32xf32>
    %28 = vector.shape_cast %27 : vector<32xf32> to vector<32x1xf32>
    %cst_10 = arith.constant 1.130000e+02 : f32
    %29 = vector.broadcast %cst_10 : f32 to vector<32x1xf32>
    %30 = arith.subf %28, %29 : vector<32x1xf32>
    %31 = arith.divf %26, %30 : vector<32x1xf32>
    %32 = vector.shape_cast %31 : vector<32x1xf32> to vector<1x32x1xf32>
    %cst_11 = arith.constant dense<0.000000e+00> : vector<1xf32>
    %33 = vector.multi_reduction <add>, %32, %cst_11 [1, 2] : vector<1x32x1xf32> to vector<1xf32>
    %34 = vector.shape_cast %33 : vector<1xf32> to vector<1x1x1xf32>
    %35 = vector.extract %34[0, 0, 0] : f32 from vector<1x1x1xf32>
    %36 = tpu.iota {dimensions = array<i32: 2>} : vector<1x1x2xi32>
    %c0_i32 = arith.constant 0 : i32
    %37 = vector.broadcast %c0_i32 : i32 to vector<1x1x2xi32>
    %38 = arith.cmpi eq, %36, %37 : vector<1x1x2xi32>
    %39 = vector.broadcast %16 : f32 to vector<1x1x2xf32>
    %40 = vector.broadcast %35 : f32 to vector<1x1x2xf32>
    %41 = arith.select %38, %39, %40 : vector<1x1x2xi1>, vector<1x1x2xf32>
    %c0_12 = arith.constant 0 : index
    %c0_13 = arith.constant 0 : index
    %c0_14 = arith.constant 0 : index
    %42 = vector.load %arg4[%c0_12, %c0_13, %c0_14] : memref<1x1x2xf32, #tpu.memory_space<vmem>>, vector<1x1x2xf32>
    tpu.vector_store %arg4[%c0_12, %c0_13, %c0_14], %41 {strides = array<i32>} : memref<1x1x2xf32, #tpu.memory_space<vmem>>, vector<1x1x2xf32>,
    return
  }
  func.func @transform_0(%arg0: i32) -> (i32, i32) {
    %c0_i32 = arith.constant 0 : i32
    %c0_i32_0 = arith.constant 0 : i32
    return %arg0, %c0_i32 : i32, i32
  }
  func.func @transform_1(%arg0: i32) -> (i32, i32) {
    %c0_i32 = arith.constant 0 : i32
    %c0_i32_0 = arith.constant 0 : i32
    return %arg0, %c0_i32 : i32, i32
  }
  func.func @transform_2(%arg0: i32) -> (i32, i32) {
    %c0_i32 = arith.constant 0 : i32
    %c0_i32_0 = arith.constant 0 : i32
    return %arg0, %c0_i32 : i32, i32
  }
  func.func @transform_3(%arg0: i32) -> (i32, i32, i32) {
    %c0_i32 = arith.constant 0 : i32
    %c0_i32_0 = arith.constant 0 : i32
    %c0_i32_1 = arith.constant 0 : i32
    return %arg0, %c0_i32, %c0_i32_0 : i32, i32, i32
  }
}

</mosaic_0001>

<llo_original>
// kernel: implication_loss.1
$region0: #{implication_loss.1}
  #allocation0 [shape = 'u32[]', space=smem, size = 0x4, offset = 0x4, fixed_abs, tag = 'smem constant byte address 0x4 - core index']
  #allocation1 [shape = 'u32[144,128]{1,0:T(1,128)}', space=vmem, size = 0x12000, scoped, tag = 'internal scratch']
  %s0 = inlined_call_operand.vmem [shape: f32[32,16], index: 0, kind: input, shape index: {}]
  %s1 = inlined_call_operand.vmem [shape: s8[32,16], index: 1, kind: input, shape index: {}]
  %s2 = inlined_call_operand.vmem [shape: f32[32,256], index: 2, kind: input, shape index: {}]
  %s3 = inlined_call_operand.vmem [shape: f32[1,1,2], index: 3, kind: output, shape index: {}]
  %s4 = sld [smem:[#allocation0]]
  $region22: #{implication_loss.1} parent=0
    _
  %s6 = ssub.s32 1, %s4
  %s7 = scalar_select 0, %s6, %s4
  // Predicated region
  $region2: #{implication_loss.1} parent=0 // pred_check
    _
  $region3: #{implication_loss.1} parent=0 // pred_check_branch
    %9 = sbr.rel (0) target = $region5
  $region4: #{implication_loss.1} parent=0 // pred_region
    _
  $region5: #{implication_loss.1} parent=0 // pred_fallthru
    _
  // Predicated region
  $region6: #{implication_loss.1} parent=0 // pred_check
    _
  $region7: #{implication_loss.1} parent=0 // pred_check_branch
    %11 = sbr.rel (0) target = $region9
  $region8: #{implication_loss.1} parent=0 // pred_region
    _
  $region9: #{implication_loss.1} parent=0 // pred_fallthru
    _
  // Predicated region
  $region10: #{implication_loss.1} parent=0 // pred_check
    _
  $region11: #{implication_loss.1} parent=0 // pred_check_branch
    %13 = sbr.rel (0) target = $region13
  $region12: #{implication_loss.1} parent=0 // pred_region
    _
  $region13: #{implication_loss.1} parent=0 // pred_fallthru
    _
  %v14 = vld [vmem:[%s0] sm:$0xff]
  %v15 = vld [vmem:[%s0 + $0x8] sm:$0xff]
  %v16 = vld [vmem:[%s0 + $0x10] sm:$0xff]
  %v17 = vld [vmem:[%s0 + $0x18] sm:$0xff]
  %v18 = vld [vmem:[%s1] sm:$0xff]
  %v19 = vunpack.c.0.s8 %v18
  %v20 = vunpack.c.1.s8 %v18
  %v21 = vunpack.c.2.s8 %v18
  %v22 = vunpack.c.3.s8 %v18
  %v23 = vcvt.s32.f32 %v19
  %v24 = vcvt.s32.f32 %v20
  %v25 = vcvt.s32.f32 %v21
  %v26 = vcvt.s32.f32 %v22
  %v27 = vmax.f32 %v14, 0.0
  %v28 = vmax.f32 %v15, 0.0
  %v29 = vmax.f32 %v16, 0.0
  %v30 = vmax.f32 %v17, 0.0
  %v31 = vmul.f32 %v14, %v23
  %v32 = vmul.f32 %v15, %v24
  %v33 = vmul.f32 %v16, %v25
  %v34 = vmul.f32 %v17, %v26
  %v35 = vsub.f32 %v27, %v31
  %v36 = vsub.f32 %v28, %v32
  %v37 = vsub.f32 %v29, %v33
  %v38 = vsub.f32 %v30, %v34
  %v39 = vand.u32 2147483647, %v14
  %v40 = vand.u32 2147483647, %v15
  %v41 = vand.u32 2147483647, %v16
  %v42 = vand.u32 2147483647, %v17
  %v43 = vsub.f32 0.0, %v39
  %v44 = vsub.f32 0.0, %v40
  %v45 = vsub.f32 0.0, %v41
  %v46 = vsub.f32 0.0, %v42
  %v47 = vmul.f32 %v43, 1.442695
  %v48 = vpow.pop %v47
  %v49 = vmul.f32 %v44, 1.442695
  %v50 = vpow.pop %v49
  %v51 = vmul.f32 %v45, 1.442695
  %v52 = vpow.pop %v51
  %v53 = vmul.f32 %v46, 1.442695
  %v54 = vpow.pop %v53
  %v55 = vadd.f32 %v48, 1.0
  %v56 = vlog2.pop %v55
  %v57 = vmul.f32 %v56, 0.6931472
  %v58 = vmul.f32 -0.5, %v48
  %v59 = vadd.f32 %v58, 1.0
  %v60 = vmul.f32 %v59, %v48
  %v61 = vand.u32 2147483647, %v48
  %vm62 = vcmp.lt.f32.partialorder %v61, 0.0004427343
  %v63 = vsel %vm62, %v60, %v57
  %v64 = vadd.f32 %v50, 1.0
  %v65 = vlog2.pop %v64
  %v66 = vmul.f32 %v65, 0.6931472
  %v67 = vmul.f32 -0.5, %v50
  %v68 = vadd.f32 %v67, 1.0
  %v69 = vmul.f32 %v68, %v50
  %v70 = vand.u32 2147483647, %v50
  %vm71 = vcmp.lt.f32.partialorder %v70, 0.0004427343
  %v72 = vsel %vm71, %v69, %v66
  %v73 = vadd.f32 %v52, 1.0
  %v74 = vlog2.pop %v73
  %v75 = vmul.f32 %v74, 0.6931472
  %v76 = vmul.f32 -0.5, %v52
  %v77 = vadd.f32 %v76, 1.0
  %v78 = vmul.f32 %v77, %v52
  %v79 = vand.u32 2147483647, %v52
  %vm80 = vcmp.lt.f32.partialorder %v79, 0.0004427343
  %v81 = vsel %vm80, %v78, %v75
  %v82 = vadd.f32 %v54, 1.0
  %v83 = vlog2.pop %v82
  %v84 = vmul.f32 %v83, 0.6931472
  %v85 = vmul.f32 -0.5, %v54
  %v86 = vadd.f32 %v85, 1.0
  %v87 = vmul.f32 %v86, %v54
  %v88 = vand.u32 2147483647, %v54
  %vm89 = vcmp.lt.f32.partialorder %v88, 0.0004427343
  %v90 = vsel %vm89, %v87, %v84
  %v91 = vadd.f32 %v35, %v63
  %v92 = vadd.f32 %v36, %v72
  %v93 = vadd.f32 %v37, %v81
  %v94 = vadd.f32 %v38, %v90
  %vm95 = vcmask 130048
  %v96 = vsel %vm95, %v91, 0.0
  %v97 = vsel %vm95, %v92, 0.0
  %v98 = vadd.f32 %v96, %v97
  %v99 = vsel %vm95, %v93, 0.0
  %v100 = vadd.f32 %v98, %v99
  %v101 = vsel %vm95, %v94, 0.0
  %v102 = vadd.f32 %v100, %v101
  %103 = vadd.xlane.f32.xlu0 %v102
  %v104 = vpop.xlane.xlu0 %103
  %v105 = vrot.slane %v104, 4
  %v106 = vadd.f32 %v104, %v105
  %v107 = vrot.slane %v106, 2
  %v108 = vadd.f32 %v106, %v107
  %v109 = vrot.slane %v108, 1
  %v110 = vadd.f32 %v108, %v109
  %s111 = vtos %v110
  %v112 = vld [vmem:[%s2] sm:$0xff]
  %v113 = vld [vmem:[%s2 + $0x8] sm:$0xff]
  %v114 = vld [vmem:[%s2 + $0x10] sm:$0xff]
  %v115 = vld [vmem:[%s2 + $0x18] sm:$0xff]
  %v116 = vld [vmem:[%s2 + $0x20] sm:$0xff]
  %v117 = vld [vmem:[%s2 + $0x28] sm:$0xff]
  %v118 = vld [vmem:[%s2 + $0x30] sm:$0xff]
  %v119 = vld [vmem:[%s2 + $0x38] sm:$0xff]
  %v120 = vsub.f32 %v112, %v113
  %v121 = vsub.f32 %v114, %v115
  %v122 = vsub.f32 %v116, %v117
  %v123 = vsub.f32 %v118, %v119
  %v124 = vmax.f32 %v120, 0.0
  %v125 = vmax.f32 %v121, 0.0
  %v126 = vmax.f32 %v122, 0.0
  %v127 = vmax.f32 %v123, 0.0
  %v128 = vmul.f32 %v124, 1.442695
  %v129 = vpow.pop %v128
  %v130 = vmul.f32 %v125, 1.442695
  %v131 = vpow.pop %v130
  %v132 = vmul.f32 %v126, 1.442695
  %v133 = vpow.pop %v132
  %v134 = vmul.f32 %v127, 1.442695
  %v135 = vpow.pop %v134
  %v136 = vmul.f32 %v129, %v124
  %v137 = vmul.f32 %v131, %v125
  %v138 = vmul.f32 %v133, %v126
  %v139 = vmul.f32 %v135, %v127
  %140 = vadd.xlane.f32.xlu0 %v136
  %v141 = vpop.xlane.xlu0 %140
  %142 = vadd.xlane.f32.xlu0 %v137
  %v143 = vpop.xlane.xlu0 %142
  %144 = vadd.xlane.f32.xlu0 %v138
  %v145 = vpop.xlane.xlu0 %144
  %146 = vadd.xlane.f32.xlu0 %v139
  %v147 = vpop.xlane.xlu0 %146
  %148 = vadd.xlane.f32.xlu0 %v129
  %v149 = vpop.xlane.xlu0 %148
  %150 = vadd.xlane.f32.xlu0 %v131
  %v151 = vpop.xlane.xlu0 %150
  %152 = vadd.xlane.f32.xlu0 %v133
  %v153 = vpop.xlane.xlu0 %152
  %154 = vadd.xlane.f32.xlu0 %v135
  %v155 = vpop.xlane.xlu0 %154
  %v156 = vsub.f32 %v149, 113.0
  %v157 = vsub.f32 %v151, 113.0
  %v158 = vsub.f32 %v153, 113.0
  %v159 = vsub.f32 %v155, 113.0
  %v160 = vrcp.pop %v156
  %v161 = vmul.f32 %v141, %v160
  %v162 = vrcp.pop %v157
  %v163 = vmul.f32 %v143, %v162
  %v164 = vrcp.pop %v158
  %v165 = vmul.f32 %v145, %v164
  %v166 = vrcp.pop %v159
  %v167 = vmul.f32 %v147, %v166
  %vm168 = vcmask 7168
  %v169 = vsel %vm168, %v161, 0.0
  %v170 = vsel %vm168, %v163, 0.0
  %v171 = vadd.f32 %v169, %v170
  %v172 = vsel %vm168, %v165, 0.0
  %v173 = vadd.f32 %v171, %v172
  %v174 = vsel %vm168, %v167, 0.0
  %v175 = vadd.f32 %v173, %v174
  %176 = vadd.xlane.f32.xlu0 %v175
  %v177 = vpop.xlane.xlu0 %176
  %v178 = vrot.slane %v177, 4
  %v179 = vadd.f32 %v177, %v178
  %v180 = vrot.slane %v179, 2
  %v181 = vadd.f32 %v179, %v180
  %v182 = vrot.slane %v181, 1
  %v183 = vadd.f32 %v181, %v182
  %s184 = vtos %v183
  %v185 = vlaneseq
  %v186 = vand.u32 %v185, 127
  %vm187 = vcmp.eq.s32.totalorder %v186, 0
  %v188 = vstv %s111
  %v189 = vstv %s184
  %v190 = vsel %vm187, %v188, %v189
  %vm191 = vcmask 8192
  %192 = vst.msk [vmem:[%s3] sm:$0x1] %vm191, %v190
  // Predicated region
  $region14: #{implication_loss.1} parent=0 // pred_check
    _
  $region15: #{implication_loss.1} parent=0 // pred_check_branch
    %194 = sbr.rel (0) target = $region17
  $region16: #{implication_loss.1} parent=0 // pred_region
    _
  $region17: #{implication_loss.1} parent=0 // pred_fallthru
    _
  // Predicated region
  $region18: #{implication_loss.1} parent=0 // pred_check
    _
  $region19: #{implication_loss.1} parent=0 // pred_check_branch
    %196 = sbr.rel (0) target = $region21
  $region20: #{implication_loss.1} parent=0 // pred_region
    _
  $region21: #{implication_loss.1} parent=0 // pred_fallthru
    _

</llo_original>
